<compile_context>
chip_gen: v7x
topology: tpu7x:2x2x1
jax: 0.10.0
libtpu: 0.0.40
codegen_flags: <defaults>
</compile_context>

<pallas_src>
import jax
import jax.numpy as jnp
from jax.experimental import pallas as pl
from jax.experimental.pallas import tpu as pltpu


def _round_up(x, m):
    return ((x + m - 1) // m) * m


def _pick_row_tile(n, cap):
    """Sublane tile: full dim if small, else a multiple-of-8 divisor (no pad), else cap."""
    if n <= cap:
        return n, n
    best = 0
    for t in range(8, cap + 1, 8):
        if n % t == 0:
            best = t
    if best:
        return best, n
    return cap, _round_up(n, cap)


def _pick_lane_tile(n, cap):
    """Lane tile (multiple of 128): prefer a divisor of n so no pad copy is needed."""
    if n % 128 == 0:
        best = 128
        for t in range(128, cap + 1, 128):
            if n % t == 0:
                best = t
        return best, n
    t = min(cap, _round_up(n, 128))
    return t, _round_up(n, t)


# --------------------- weighted softmax cross-entropy -----------------------

def _ce_tile_kernel(logits_ref, tgt_ref, w_ref, num_ref, den_ref):
    """Per (layer, row-tile) partial sums of w_t*nll and w_t (division done in JAX)."""
    x = logits_ref[0].astype(jnp.float32)            # (TR, Cp)
    t = tgt_ref[0]                                   # (TR, 1) i32
    w = w_ref[0].astype(jnp.float32)                 # (1, Cp)
    TR, Cp = x.shape
    cls = jax.lax.broadcasted_iota(jnp.int32, (TR, Cp), 1)
    onehot = (cls == t).astype(jnp.float32)
    m = jnp.max(x, axis=-1, keepdims=True)
    lse = jnp.log(jnp.sum(jnp.exp(x - m), axis=-1, keepdims=True)) + m
    logit_t = jnp.sum(x * onehot, axis=-1, keepdims=True)
    w_t = jnp.sum(w * onehot, axis=-1, keepdims=True)
    nll = lse - logit_t
    num_ref[...] = jnp.full(num_ref.shape, jnp.sum(w_t * nll), jnp.float32)
    den_ref[...] = jnp.full(den_ref.shape, jnp.sum(w_t), jnp.float32)


def batched_weighted_ce(logits_lbqc, targets_lbq, class_weight):
    """F.cross_entropy(logits.transpose(1,2), targets, weight) per decoder layer.

    logits_lbqc: [L, B, Q, C1] (native dtype), targets_lbq: [L, B, Q] int,
    class_weight: [C1] f32. Returns [L] f32 losses, one pallas_call for all layers."""
    L, B, Q, C1 = logits_lbqc.shape
    R = B * Q
    Cp = _round_up(max(C1, 128), 128)
    TR, Rpad = _pick_row_tile(R, 512)
    if Rpad != R and Cp == C1:
        Cp += 128                      # guarantee a zero-weight padding class for padded rows
    logits = logits_lbqc.reshape(L, R, C1)
    if Cp != C1:                       # pad classes with a large negative (max/lse unaffected)
        logits = jnp.pad(logits, ((0, 0), (0, 0), (0, Cp - C1)), constant_values=-1e9)
    tgt = targets_lbq.reshape(L, R, 1).astype(jnp.int32)
    if Rpad != R:                      # padded rows point at a zero-weight class -> contribute 0
        logits = jnp.pad(logits, ((0, 0), (0, Rpad - R), (0, 0)))
        tgt = jnp.pad(tgt, ((0, 0), (0, Rpad - R), (0, 0)), constant_values=C1)
    w = jnp.pad(class_weight.astype(jnp.float32), (0, Cp - C1)).reshape(1, 1, Cp)
    rt = Rpad // TR
    num, den = pl.pallas_call(
        _ce_tile_kernel,
        out_shape=(jax.ShapeDtypeStruct((L * rt, 1, 128), jnp.float32),
                   jax.ShapeDtypeStruct((L * rt, 1, 128), jnp.float32)),
        grid=(L, rt),
        in_specs=[pl.BlockSpec((1, TR, Cp), lambda l, r: (l, r, 0)),
                  pl.BlockSpec((1, TR, 1), lambda l, r: (l, r, 0)),
                  pl.BlockSpec((1, 1, Cp), lambda l, r: (0, 0, 0))],
        out_specs=(pl.BlockSpec((1, 1, 128), lambda l, r: (l * rt + r, 0, 0)),
                   pl.BlockSpec((1, 1, 128), lambda l, r: (l * rt + r, 0, 0))),
        compiler_params=pltpu.CompilerParams(
            dimension_semantics=("parallel", "parallel")),
    )(logits, tgt, w)
    num = num[:, 0, 0].reshape(L, rt).sum(axis=1)
    den = den[:, 0, 0].reshape(L, rt).sum(axis=1)
    return num / den                                  # [L]


# --------------------- fused sigmoid-BCE + dice (point losses) ---------------

def _mask_loss_kernel(x_ref, y_ref, ce_ref, dice_ref, s_bce, s_py, s_p, s_y):
    """Grid = (layers, row_tiles, point_tiles); point axis innermost ("arbitrary").

    Per point tile: 128-lane VPU accumulation into (TN, 128) scratch.  A single XLU
    cross-lane reduce per accumulator happens only at the last point tile."""
    p_id = pl.program_id(2)

    @pl.when(p_id == 0)
    def _():
        s_bce[...] = jnp.zeros_like(s_bce)
        s_py[...] = jnp.zeros_like(s_py)
        s_p[...] = jnp.zeros_like(s_p)
        s_y[...] = jnp.zeros_like(s_y)

    TN = x_ref.shape[1]
    TP = x_ref.shape[2]
    acc_bce = jnp.zeros((TN, 128), jnp.float32)
    acc_py = jnp.zeros((TN, 128), jnp.float32)
    acc_p = jnp.zeros((TN, 128), jnp.float32)
    acc_y = jnp.zeros((TN, 128), jnp.float32)
    for a in range(TP // 128):                       # static, lane-aligned 128-wide chunks
        x = x_ref[0, :, a * 128:(a + 1) * 128].astype(jnp.float32)
        y = y_ref[0, :, a * 128:(a + 1) * 128].astype(jnp.float32)
        # One EUP exp feeds both the BCE log-term and the sigmoid.
        e = jnp.exp(-jnp.abs(x))
        bce = jnp.maximum(x, 0.0) - x * y + jnp.log1p(e)
        r = 1.0 / (1.0 + e)
        prob = jnp.where(x >= 0.0, r, e * r)         # exact sigmoid(x)
        acc_bce = acc_bce + bce
        acc_py = acc_py + prob * y
        acc_p = acc_p + prob
        acc_y = acc_y + y
    s_bce[...] += acc_bce
    s_py[...] += acc_py
    s_p[...] += acc_p
    s_y[...] += acc_y

    @pl.when(p_id == pl.num_programs(2) - 1)
    def _():
        bce_rows = jnp.sum(s_bce[...], axis=1, keepdims=True)       # (TN, 1)
        py_rows = jnp.sum(s_py[...], axis=1, keepdims=True)
        p_rows = jnp.sum(s_p[...], axis=1, keepdims=True)
        y_rows = jnp.sum(s_y[...], axis=1, keepdims=True)
        dice_rows = 1.0 - (2.0 * py_rows + 1.0) / (p_rows + y_rows + 1.0)
        ce_ref[...] = jnp.full(ce_ref.shape, jnp.sum(bce_rows), jnp.float32)
        dice_ref[...] = jnp.full(dice_ref.shape, jnp.sum(dice_rows), jnp.float32)


def batched_mask_point_losses(point_logits, point_labels, num_masks):
    """sigmoid_ce_loss + dice_loss per decoder layer in one pallas_call.

    point_logits / point_labels: [L, N, P] (native dtype, e.g. bf16).  The /P mean and
    /num_masks are applied OUTSIDE the kernel (traced, no recompiles)."""
    L, N, P = point_logits.shape
    TN, Npad = _pick_row_tile(N, 256)
    TP, Ppad = _pick_lane_tile(P, 2048)

    x, y = point_logits, point_labels
    if Npad != N or Ppad != P:
        pad_np = ((0, 0), (0, Npad - N), (0, Ppad - P))
        # Neutral padding: logit -1e4, label 0 -> bce == 0, prob == 0, dice_row == 0.
        x = jnp.pad(x, pad_np, constant_values=-1e4)
        y = jnp.pad(y, pad_np, constant_values=0)
    nt, pt = Npad // TN, Ppad // TP

    ce, dice = pl.pallas_call(
        _mask_loss_kernel,
        out_shape=(jax.ShapeDtypeStruct((L * nt, 1, 128), jnp.float32),
                   jax.ShapeDtypeStruct((L * nt, 1, 128), jnp.float32)),
        grid=(L, nt, pt),
        in_specs=[pl.BlockSpec((1, TN, TP), lambda l, r, p: (l, r, p)),
                  pl.BlockSpec((1, TN, TP), lambda l, r, p: (l, r, p))],
        out_specs=(pl.BlockSpec((1, 1, 128), lambda l, r, p: (l * nt + r, 0, 0)),
                   pl.BlockSpec((1, 1, 128), lambda l, r, p: (l * nt + r, 0, 0))),
        scratch_shapes=[pltpu.VMEM((TN, 128), jnp.float32)] * 4,
        compiler_params=pltpu.CompilerParams(
            dimension_semantics=("parallel", "parallel", "arbitrary")),
    )(x, y)
    loss_mask = ce[:, 0, 0].reshape(L, nt).sum(axis=1) / (float(P) * num_masks)
    loss_dice = dice[:, 0, 0].reshape(L, nt).sum(axis=1) / num_masks
    return loss_mask, loss_dice


# ----------------------------- edge BCE --------------------------------------

def _edge_bce_kernel(x_ref, y_ref, out_ref):
    x = x_ref[0].astype(jnp.float32)
    y = y_ref[0].astype(jnp.float32)
    e = jnp.exp(-jnp.abs(x))
    bce = jnp.maximum(x, 0.0) - x * y + jnp.log1p(e)
    out_ref[...] = jnp.full(out_ref.shape, jnp.sum(bce), jnp.float32)


def edge_bce_sum(pred_edge, target_edge):
    """Sum of BCE-with-logits over the whole edge map (mean/weight applied outside).

    Lane-dense 512-wide slabs of the flattened map; any ragged tail is reduced in plain
    JAX so no pad copy is ever materialized."""
    flat_x = pred_edge.reshape(-1)
    flat_y = target_edge.reshape(-1)
    total = flat_x.shape[0]
    LANES = 512 if total >= 512 else 128
    rows = total // LANES
    loss = jnp.float32(0.0)
    main = 0
    if rows > 0:
        TR, rpad = _pick_row_tile(rows, 512)
        T = rows // TR
        main = T * TR * LANES
        xm = flat_x[:main].reshape(T, TR, LANES)
        ym = flat_y[:main].reshape(T, TR, LANES)
        out = pl.pallas_call(
            _edge_bce_kernel,
            out_shape=jax.ShapeDtypeStruct((T, 1, 128), jnp.float32),
            grid=(T,),
            in_specs=[pl.BlockSpec((1, TR, LANES), lambda t: (t, 0, 0)),
                      pl.BlockSpec((1, TR, LANES), lambda t: (t, 0, 0))],
            out_specs=pl.BlockSpec((1, 1, 128), lambda t: (t, 0, 0)),
            compiler_params=pltpu.CompilerParams(dimension_semantics=("parallel",)),
        )(xm, ym)
        loss = loss + jnp.sum(out[:, 0, 0])
    if main < total:
        xt = flat_x[main:].astype(jnp.float32)
        yt = flat_y[main:].astype(jnp.float32)
        e = jnp.exp(-jnp.abs(xt))
        loss = loss + jnp.sum(jnp.maximum(xt, 0.0) - xt * yt + jnp.log1p(e))
    return loss


# -------------------- point sampling (bilinear) ------------------------------

_POINT_SAMPLE_PALLAS_MAX_HW = 2048    # above this the dense one-hot is wasteful; use XLA gather


def _point_sample_kernel(img_ref, idx_ref, w_ref, out_ref):
    """Bilinear point sampling via a small bf16 MXU one-hot matmul (small H*W only).

    img_ref: (1, K, HW); idx_ref/w_ref: (1, 4, TP); out_ref: (1, K, TP).  The P axis is
    tiled via the grid so the one-hot never exceeds (HW, TP).
    TODO(synk): a DMA-gather kernel would beat this for mid-sized HW; large HW already
    falls back to a per-corner XLA gather in the wrapper."""
    img = img_ref[0].astype(jnp.bfloat16)             # (K, HW)
    idx = idx_ref[0]                                   # (4, TP) i32
    w = w_ref[0]                                       # (4, TP) f32
    K, HW = img.shape
    TP = idx.shape[1]
    hw_iota = jax.lax.broadcasted_iota(jnp.int32, (HW, TP), 0)
    m = w[0:1, :] * (hw_iota == idx[0:1, :]).astype(jnp.float32)
    for c in range(1, 4):
        m = m + w[c:c + 1, :] * (hw_iota == idx[c:c + 1, :]).astype(jnp.float32)
    out = jnp.dot(img, m.astype(jnp.bfloat16), preferred_element_type=jnp.float32)
    out_ref[0] = out.astype(out_ref.dtype)


def _bilinear_corners(coords, H, W):
    """Corner flat indices [N,4,P] + weights [N,4,P] for grid_sample(bilinear,
    padding_mode='zeros', align_corners=False). coords: [N, P, 2] (x, y) in [0,1]."""
    ix = coords[..., 0] * W - 0.5
    iy = coords[..., 1] * H - 0.5
    ix0 = jnp.floor(ix)
    iy0 = jnp.floor(iy)
    wx1 = ix - ix0
    wx0 = 1.0 - wx1
    wy1 = iy - iy0
    wy0 = 1.0 - wy1
    idxs, ws = [], []
    for xi, wxi in ((ix0, wx0), (ix0 + 1.0, wx1)):
        for yi, wyi in ((iy0, wy0), (iy0 + 1.0, wy1)):
            valid = (xi >= 0) & (xi <= W - 1) & (yi >= 0) & (yi <= H - 1)
            xc = jnp.clip(xi, 0, W - 1).astype(jnp.int32)
            yc = jnp.clip(yi, 0, H - 1).astype(jnp.int32)
            idxs.append(yc * W + xc)
            ws.append((wxi * wyi) * valid.astype(jnp.float32))
    return jnp.stack(idxs, axis=1), jnp.stack(ws, axis=1)


def point_sample(imgs, coords, out_dtype=jnp.float32):
    """grid_sample(mode='bilinear', padding_mode='zeros', align_corners=False) on point
    grids. imgs: [N, K, H, W]; coords: [N, P, 2] -> [N, K, P]."""
    N, K, H, W = imgs.shape
    P = coords.shape[1]
    idx, w = _bilinear_corners(coords.astype(jnp.float32), H, W)     # [N, 4, P] each
    flat = imgs.reshape(N, K, H * W)
    if H * W <= _POINT_SAMPLE_PALLAS_MAX_HW:
        TP, Ppad = _pick_lane_tile(P, 512)
        if Ppad != P:
            idx = jnp.pad(idx, ((0, 0), (0, 0), (0, Ppad - P)))
            w = jnp.pad(w, ((0, 0), (0, 0), (0, Ppad - P)))
        out = pl.pallas_call(
            _point_sample_kernel,
            out_shape=jax.ShapeDtypeStruct((N, K, Ppad), out_dtype),
            grid=(N, Ppad // TP),
            in_specs=[pl.BlockSpec((1, K, H * W), lambda n, p: (n, 0, 0)),
                      pl.BlockSpec((1, 4, TP), lambda n, p: (n, 0, p)),
                      pl.BlockSpec((1, 4, TP), lambda n, p: (n, 0, p))],
            out_specs=pl.BlockSpec((1, K, TP), lambda n, p: (n, 0, p)),
            compiler_params=pltpu.CompilerParams(
                dimension_semantics=("parallel", "parallel"),
                vmem_limit_bytes=48 * 1024 * 1024),
        )(flat, idx, w)
        return out[:, :, :P] if Ppad != P else out
    # Large H*W: per-corner XLA gathers -> O(N*K*4*P) HBM traffic (no H*W-sized broadcast).
    acc = jnp.zeros((N, K, P), jnp.float32)
    for c in range(4):
        g = jnp.take_along_axis(
            flat, jnp.broadcast_to(idx[:, None, c, :], (N, K, P)), axis=2)
        acc = acc + g.astype(jnp.float32) * w[:, None, c, :]
    return acc.astype(out_dtype)


def calculate_uncertainty(logits):
    assert logits.shape[1] == 1
    return -jnp.abs(logits)


def get_uncertain_point_coords_with_randomness(key, coarse_logits, num_points,
                                               oversample_ratio,
                                               importance_sample_ratio):
    N = coarse_logits.shape[0]
    num_sampled = int(num_points * oversample_ratio)
    k1, k2 = jax.random.split(key)
    point_coords = jax.random.uniform(k1, (N, num_sampled, 2), dtype=jnp.float32)
    point_logits = point_sample(coarse_logits, point_coords)          # [N, 1, S]
    point_unc = calculate_uncertainty(point_logits)[:, 0, :]          # [N, S]
    num_uncertain = int(importance_sample_ratio * num_points)
    num_random = num_points - num_uncertain
    idx = jax.lax.top_k(point_unc, num_uncertain)[1]                  # [N, k]
    uncertain_coords = jnp.take_along_axis(point_coords, idx[:, :, None], axis=1)
    if num_random > 0:
        rand_coords = jax.random.uniform(k2, (N, num_random, 2), dtype=jnp.float32)
        return jnp.concatenate([uncertain_coords, rand_coords], axis=1)
    return uncertain_coords


def identity_matcher(outputs, targets):
    # TODO(synk): Hungarian matching (scipy.optimize.linear_sum_assignment) has no
    # clean Pallas/TPU equivalent; a deterministic identity matcher is used here.
    return [(jnp.arange(len(t['labels']), dtype=jnp.int32),
             jnp.arange(len(t['labels']), dtype=jnp.int32)) for t in targets]


# ----------------------------- SetCriterion ---------------------------------

class SetCriterion:
    def __init__(self, num_classes, matcher, weight_dict, eos_coef, losses,
                 num_points, oversample_ratio, importance_sample_ratio):
        self.num_classes = num_classes
        self.matcher = matcher
        self.weight_dict = weight_dict
        self.eos_coef = eos_coef
        self.losses = losses
        self.empty_weight = jnp.ones(num_classes + 1, jnp.float32).at[-1].set(eos_coef)
        self.num_points = num_points
        self.oversample_ratio = oversample_ratio
        self.importance_sample_ratio = importance_sample_ratio

    # ---- per-loss helpers (batched over decoder layers) ----

    def _labels_losses(self, layer_outputs, targets, indices_per_layer):
        B, Q, _ = layer_outputs[0]['pred_logits'].shape
        logits_l = jnp.stack([lo['pred_logits'] for lo in layer_outputs], axis=0)
        tgt_cls = []
        for ind in indices_per_layer:                 # one scatter per layer
            b_idx = jnp.concatenate(
                [jnp.full(src.shape, b, jnp.int32) for b, (src, _) in enumerate(ind)])
            s_idx = jnp.concatenate([src.astype(jnp.int32) for src, _ in ind])
            lab = jnp.concatenate(
                [targets[b]['labels'][tgt].astype(jnp.int32)
                 for b, (_, tgt) in enumerate(ind)])
            tc = jnp.full((B, Q), self.num_classes, jnp.int32).at[b_idx, s_idx].set(lab)
            tgt_cls.append(tc)
        tgt_cls = jnp.stack(tgt_cls, axis=0)
        return batched_weighted_ce(logits_l, tgt_cls, self.empty_weight)      # [L]

    def _mask_losses(self, layer_outputs, targets, indices_per_layer, num_masks, rng):
        all_tgt_masks = jnp.concatenate([t['masks'] for t in targets], axis=0)
        offs = [0]
        for t in targets:
            offs.append(offs[-1] + t['masks'].shape[0])
        src_all, tgt_all = [], []
        for li, lo in enumerate(layer_outputs):       # one gather per layer per side
            pm = lo['pred_masks']                     # [B, Q, H, W]
            ind = indices_per_layer[li]
            b_idx = jnp.concatenate(
                [jnp.full(src.shape, b, jnp.int32) for b, (src, _) in enumerate(ind)])
            s_idx = jnp.concatenate([src.astype(jnp.int32) for src, _ in ind])
            t_idx = jnp.concatenate(
                [tgt.astype(jnp.int32) + offs[b] for b, (_, tgt) in enumerate(ind)])
            src_all.append(pm[b_idx, s_idx])
            tgt_all.append(all_tgt_masks[t_idx].astype(pm.dtype))
        src_m = jnp.stack(src_all, axis=0)            # [L, N, H, W]
        tgt_m = jnp.stack(tgt_all, axis=0)
        L, N, H, W = src_m.shape
        src_flat = src_m.reshape(L * N, 1, H, W)
        tgt_flat = tgt_m.reshape(L * N, 1, H, W)
        coords = get_uncertain_point_coords_with_randomness(
            rng, src_flat, self.num_points, self.oversample_ratio,
            self.importance_sample_ratio)             # [(L*N), P, 2]
        # Sample logits & labels together and emit bf16: halves the HBM round trip into
        # the bandwidth-bound mask-loss kernel (f32 math happens in-register there).
        # TODO(synk): a fully fused sample+loss kernel would remove the round trip.
        pair = jnp.concatenate([src_flat, tgt_flat], axis=1)          # [(L*N), 2, H, W]
        sampled = point_sample(pair, coords, out_dtype=jnp.bfloat16)  # [(L*N), 2, P]
        point_logits = sampled[:, 0, :].reshape(L, N, -1)
        point_labels = sampled[:, 1, :].reshape(L, N, -1)
        return batched_mask_point_losses(point_logits, point_labels, num_masks)

    def loss_edge(self, outputs, targets):
        if 'pred_edges' not in outputs:
            return {}
        pred_edge = outputs['pred_edges']
        edge_targets = jnp.stack([t['edge'] for t in targets])
        if edge_targets.shape[-2:] != pred_edge.shape[-2:]:
            edge_targets = jax.image.resize(
                edge_targets.astype(jnp.float32),
                edge_targets.shape[:-2] + pred_edge.shape[-2:], method='bilinear')
        weight = self.weight_dict.get('loss_edge', 1.0)
        B, C, H, W = pred_edge.shape
        # NOTE: F.binary_cross_entropy(sigmoid(x), y) == BCE-with-logits(x, y) apart
        # from torch's log-clamp at -100 (only differs for |x| >~ 100).
        loss = weight * edge_bce_sum(pred_edge, edge_targets) / float(B * C * H * W)
        return {'loss_edge': loss}

    # ---- forward ----

    def forward(self, outputs, targets, rng):
        for loss in self.losses:
            assert loss in ('labels', 'masks', 'edge'), \
                f'do you really want to compute {loss} loss?'
        outputs_without_aux = {k: v for k, v in outputs.items() if k != 'aux_outputs'}
        aux_outputs = outputs.get('aux_outputs', [])
        layer_outputs = [outputs_without_aux] + list(aux_outputs)
        indices_per_layer = [self.matcher(lo, targets) for lo in layer_outputs]
        L = len(layer_outputs)

        # single-host: world_size = 1
        num_masks = max(float(sum(len(t['labels']) for t in targets)), 1.0)

        def key_for(name, li):
            return name if li == 0 else f'{name}_{li - 1}'

        losses = {}
        if 'labels' in self.losses:
            ce = self._labels_losses(layer_outputs, targets, indices_per_layer)
            for li in range(L):
                losses[key_for('loss_ce', li)] = ce[li]
        if 'masks' in self.losses:
            rng, sub = jax.random.split(rng)
            l_mask, l_dice = self._mask_losses(layer_outputs, targets,
                                               indices_per_layer, num_masks, sub)
            for li in range(L):
                losses[key_for('loss_mask', li)] = l_mask[li]
                losses[key_for('loss_dice', li)] = l_dice[li]
        if 'edge' in self.losses:
            losses.update(self.loss_edge(outputs, targets))   # main output only
        return losses


# ----------------------------- main ------------------------------------------

if __name__ == "__main__":
    key = jax.random.PRNGKey(0)
    B, Q, NC, H, W = 2, 8, 4, 16, 16
    num_points, oversample, imp_ratio = 16, 3, 0.75
    n_tgt = 3

    ks = jax.random.split(key, 10)
    pred_logits = jax.random.normal(ks[0], (B, Q, NC + 1), jnp.float32)
    pred_masks = jax.random.normal(ks[1], (B, Q, H, W), jnp.float32)
    pred_edges = jax.random.normal(ks[2], (B, 1, H, W), jnp.float32)
    aux_logits = jax.random.normal(ks[3], (B, Q, NC + 1), jnp.float32)
    aux_masks = jax.random.normal(ks[4], (B, Q, H, W), jnp.float32)

    targets = []
    for b in range(B):
        labels = jax.random.randint(ks[5 + b], (n_tgt,), 0, NC)
        masks = (jax.random.uniform(ks[7 + b], (n_tgt, H, W)) > 0.5).astype(jnp.float32)
        edge = (jax.random.uniform(ks[9], (1, H, W)) > 0.7).astype(jnp.float32)
        targets.append({'labels': labels, 'masks': masks, 'edge': edge})

    outputs = {
        'pred_logits': pred_logits,
        'pred_masks': pred_masks,
        'pred_edges': pred_edges,
        'aux_outputs': [{'pred_logits': aux_logits, 'pred_masks': aux_masks}],
    }
    weight_dict = {'loss_ce': 2.0, 'loss_mask': 5.0, 'loss_dice': 5.0, 'loss_edge': 1.0}

    criterion = SetCriterion(
        num_classes=NC, matcher=identity_matcher, weight_dict=weight_dict,
        eos_coef=0.1, losses=['labels', 'masks', 'edge'],
        num_points=num_points, oversample_ratio=oversample,
        importance_sample_ratio=imp_ratio)

    losses = criterion.forward(outputs, targets, jax.random.PRNGKey(42))
    losses = {k: jax.block_until_ready(v) for k, v in losses.items()}
    _ = {k: float(v) for k, v in losses.items()}
    print("KERNEL_OK")
</pallas_src>

<mosaic_0001>
module attributes {stable_mosaic.version = 11 : i64} {
  func.func @_ce_tile_kernel(%arg0: i32, %arg1: i32, %arg2: memref<1x16x128xf32, #tpu.memory_space<vmem>>, %arg3: memref<1x16x1xi32, #tpu.memory_space<vmem>>, %arg4: memref<1x1x128xf32, #tpu.memory_space<vmem>>, %arg5: memref<1x1x128xf32, #tpu.memory_space<vmem>>, %arg6: memref<1x1x128xf32, #tpu.memory_space<vmem>>) attributes {dimension_semantics = [#tpu.dimension_semantics<parallel>, #tpu.dimension_semantics<parallel>], iteration_bounds = array<i64: 2, 1>, scalar_prefetch = 0 : i64, scratch_operands = 0 : i64, tpu.core_type = #tpu.core_type<tc>, window_params = [{transform_indices = @transform_0, window_bounds = array<i64: 1, 16, 128>}, {transform_indices = @transform_1, window_bounds = array<i64: 1, 16, 1>}, {pipeline_mode = #tpu.pipeline_mode<synchronous>, transform_indices = @transform_2, window_bounds = array<i64: 1, 1, 128>}, {transform_indices = @transform_3, window_bounds = array<i64: 1, 1, 128>}, {transform_indices = @transform_4, window_bounds = array<i64: 1, 1, 128>}]} {
    %c0 = arith.constant 0 : index
    %c0_0 = arith.constant 0 : index
    %c0_1 = arith.constant 0 : index
    %0 = vector.load %arg2[%c0, %c0_0, %c0_1] : memref<1x16x128xf32, #tpu.memory_space<vmem>>, vector<1x16x128xf32>
    %1 = vector.shape_cast %0 : vector<1x16x128xf32> to vector<16x128xf32>
    %c0_2 = arith.constant 0 : index
    %c0_3 = arith.constant 0 : index
    %c0_4 = arith.constant 0 : index
    %2 = vector.load %arg3[%c0_2, %c0_3, %c0_4] : memref<1x16x1xi32, #tpu.memory_space<vmem>>, vector<1x16x1xi32>
    %3 = vector.shape_cast %2 : vector<1x16x1xi32> to vector<16x1xi32>
    %c0_5 = arith.constant 0 : index
    %c0_6 = arith.constant 0 : index
    %c0_7 = arith.constant 0 : index
    %4 = vector.load %arg4[%c0_5, %c0_6, %c0_7] : memref<1x1x128xf32, #tpu.memory_space<vmem>>, vector<1x1x128xf32>
    %5 = vector.shape_cast %4 : vector<1x1x128xf32> to vector<1x128xf32>
    %6 = tpu.iota {dimensions = array<i32: 1>} : vector<16x128xi32>
    %7 = vector.broadcast %3 : vector<16x1xi32> to vector<16x128xi32>
    %8 = arith.cmpi eq, %6, %7 : vector<16x128xi32>
    %9 = arith.extui %8 : vector<16x128xi1> to vector<16x128xi32>
    %10 = arith.sitofp %9 : vector<16x128xi32> to vector<16x128xf32>
    %cst = arith.constant dense<0xFF800000> : vector<16xf32>
    %11 = vector.multi_reduction <maximumf>, %1, %cst [1] : vector<16x128xf32> to vector<16xf32>
    %12 = vector.shape_cast %11 : vector<16xf32> to vector<16x1xf32>
    %13 = vector.broadcast %12 : vector<16x1xf32> to vector<16x128xf32>
    %14 = arith.subf %1, %13 : vector<16x128xf32>
    %15 = math.exp %14 : vector<16x128xf32>
    %cst_8 = arith.constant dense<0.000000e+00> : vector<16xf32>
    %16 = vector.multi_reduction <add>, %15, %cst_8 [1] : vector<16x128xf32> to vector<16xf32>
    %17 = vector.shape_cast %16 : vector<16xf32> to vector<16x1xf32>
    %18 = math.log %17 : vector<16x1xf32>
    %19 = arith.addf %18, %12 : vector<16x1xf32>
    %20 = arith.mulf %1, %10 : vector<16x128xf32>
    %cst_9 = arith.constant dense<0.000000e+00> : vector<16xf32>
    %21 = vector.multi_reduction <add>, %20, %cst_9 [1] : vector<16x128xf32> to vector<16xf32>
    %22 = vector.shape_cast %21 : vector<16xf32> to vector<16x1xf32>
    %23 = vector.broadcast %5 : vector<1x128xf32> to vector<16x128xf32>
    %24 = arith.mulf %23, %10 : vector<16x128xf32>
    %cst_10 = arith.constant dense<0.000000e+00> : vector<16xf32>
    %25 = vector.multi_reduction <add>, %24, %cst_10 [1] : vector<16x128xf32> to vector<16xf32>
    %26 = vector.shape_cast %25 : vector<16xf32> to vector<16x1xf32>
    %27 = arith.subf %19, %22 : vector<16x1xf32>
    %28 = arith.mulf %26, %27 : vector<16x1xf32>
    %29 = vector.shape_cast %28 : vector<16x1xf32> to vector<1x16x1xf32>
    %cst_11 = arith.constant dense<0.000000e+00> : vector<1xf32>
    %30 = vector.multi_reduction <add>, %29, %cst_11 [1, 2] : vector<1x16x1xf32> to vector<1xf32>
    %31 = vector.shape_cast %30 : vector<1xf32> to vector<1x1x1xf32>
    %32 = vector.extract %31[0, 0, 0] : f32 from vector<1x1x1xf32>
    %33 = vector.broadcast %32 : f32 to vector<1x1x128xf32>
    %c0_12 = arith.constant 0 : index
    %c0_13 = arith.constant 0 : index
    %c0_14 = arith.constant 0 : index
    %34 = vector.load %arg5[%c0_12, %c0_13, %c0_14] : memref<1x1x128xf32, #tpu.memory_space<vmem>>, vector<1x1x128xf32>
    tpu.vector_store %arg5[%c0_12, %c0_13, %c0_14], %33 {strides = array<i32>} : memref<1x1x128xf32, #tpu.memory_space<vmem>>, vector<1x1x128xf32>,
    %35 = vector.shape_cast %26 : vector<16x1xf32> to vector<1x16x1xf32>
    %cst_15 = arith.constant dense<0.000000e+00> : vector<1xf32>
    %36 = vector.multi_reduction <add>, %35, %cst_15 [1, 2] : vector<1x16x1xf32> to vector<1xf32>
    %37 = vector.shape_cast %36 : vector<1xf32> to vector<1x1x1xf32>
    %38 = vector.extract %37[0, 0, 0] : f32 from vector<1x1x1xf32>
    %39 = vector.broadcast %38 : f32 to vector<1x1x128xf32>
    %c0_16 = arith.constant 0 : index
    %c0_17 = arith.constant 0 : index
    %c0_18 = arith.constant 0 : index
    %40 = vector.load %arg6[%c0_16, %c0_17, %c0_18] : memref<1x1x128xf32, #tpu.memory_space<vmem>>, vector<1x1x128xf32>
    tpu.vector_store %arg6[%c0_16, %c0_17, %c0_18], %39 {strides = array<i32>} : memref<1x1x128xf32, #tpu.memory_space<vmem>>, vector<1x1x128xf32>,
    return
  }
  func.func @transform_0(%arg0: i32, %arg1: i32) -> (i32, i32, i32) {
    %c0_i32 = arith.constant 0 : i32
    %c0_i32_0 = arith.constant 0 : i32
    return %arg0, %arg1, %c0_i32 : i32, i32, i32
  }
  func.func @transform_1(%arg0: i32, %arg1: i32) -> (i32, i32, i32) {
    %c0_i32 = arith.constant 0 : i32
    %c0_i32_0 = arith.constant 0 : i32
    return %arg0, %arg1, %c0_i32 : i32, i32, i32
  }
  func.func @transform_2(%arg0: i32, %arg1: i32) -> (i32, i32, i32) {
    %c0_i32 = arith.constant 0 : i32
    %c0_i32_0 = arith.constant 0 : i32
    %c0_i32_1 = arith.constant 0 : i32
    %c0_i32_2 = arith.constant 0 : i32
    return %c0_i32, %c0_i32_0, %c0_i32_1 : i32, i32, i32
  }
  func.func @transform_3(%arg0: i32, %arg1: i32) -> (i32, i32, i32) {
    %c1_i32 = arith.constant 1 : i32
    %0 = arith.muli %arg0, %c1_i32 : i32
    %1 = arith.addi %0, %arg1 : i32
    %c0_i32 = arith.constant 0 : i32
    %c0_i32_0 = arith.constant 0 : i32
    %c0_i32_1 = arith.constant 0 : i32
    return %1, %c0_i32, %c0_i32_0 : i32, i32, i32
  }
  func.func @transform_4(%arg0: i32, %arg1: i32) -> (i32, i32, i32) {
    %c1_i32 = arith.constant 1 : i32
    %0 = arith.muli %arg0, %c1_i32 : i32
    %1 = arith.addi %0, %arg1 : i32
    %c0_i32 = arith.constant 0 : i32
    %c0_i32_0 = arith.constant 0 : i32
    %c0_i32_1 = arith.constant 0 : i32
    return %1, %c0_i32, %c0_i32_0 : i32, i32, i32
  }
}

</mosaic_0001>

<llo_original>
// kernel: tpu_custom_call.1
$region0: #{tpu_custom_call.1}
  #allocation0 [shape = 'u32[]', space=smem, size = 0x4, offset = 0x4, fixed_abs, tag = 'smem constant byte address 0x4 - core index']
  #allocation1 [shape = 'u32[144,128]{1,0:T(1,128)}', space=vmem, size = 0x12000, scoped, tag = 'internal scratch']
  %s0 = inlined_call_operand.vmem [shape: f32[2,16,128], index: 0, kind: input, shape index: {}]
  %s1 = inlined_call_operand.vmem [shape: s32[2,16,1], index: 1, kind: input, shape index: {}]
  %s2 = inlined_call_operand.vmem [shape: f32[1,1,128], index: 2, kind: input, shape index: {}]
  %s3 = inlined_call_operand.hbm [shape: f32[2,1,128], index: 3, kind: output, shape index: {0}]
  %s4 = inlined_call_operand.hbm [shape: f32[2,1,128], index: 4, kind: output, shape index: {1}]
  %5 = xla_tuple %s3, %s4
  %s6 = sld [smem:[#allocation0]]
  $region53: #{tpu_custom_call.1} parent=0
    _
  %s8 = ssub.s32 1, %s6
  %s9 = scalar_select 0, %s8, %s6
  $region1: #{tpu_custom_call.1} parent=0
    #allocation2 [shape = 'u8[1024]{0}', space=vmem, size = 0x400, scoped, tag = 'output window, operand 0']
    #allocation3 [shape = 's32[2]{0}', space=sflag, size = 0x8, scoped, tag = 'scoped memory for tpu_custom_call.1']
    #allocation4 [shape = 'u8[1024]{0}', space=vmem, size = 0x400, scoped, tag = 'output window, operand 1']
    #allocation5 [shape = 's32[2]{0}', space=sflag, size = 0x8, scoped, tag = 'scoped memory for tpu_custom_call.1']
    %10 = vsyncpa [#allocation3], 0
    %s11 = scalar_lea.sflag [#allocation3], 1
    %12 = vsyncpa %s11, 0
    %13 = vsyncpa [#allocation5], 0
    %s14 = scalar_lea.sflag [#allocation5], 1
    %15 = vsyncpa %s14, 0
    loop: start=0, step=1, limit=4
    $region2: #{tpu_custom_call.1} parent=1 // loop_pre_header
      _
    $region3: #{tpu_custom_call.1} parent=1 // loop_header
      %s17 = sphi 0, %s21
      %p18 = scmp.ge.s32.totalorder %s17, 4
      %s24 = sphi 0, %s36
      %s25 = sphi 0, %s32
      %s26 = sphi 0, %s24
      %s27 = sphi 0, %s25
      %s28 = sphi 0, %s26
      %s29 = sphi 0, %s27
      %s41 = sphi 0, %s43
      %s44 = sphi 0, %s41
      %s45 = sphi 0, %s44
      %s61 = sphi 0, %s45
      %s69 = sphi 0, %s71
      %s72 = sphi 0, %s69
      %s73 = sphi 0, %s72
      %s89 = sphi 0, %s73
      %s93 = sphi 0, %s93
      %s95 = sphi 0, %s93
      %s96 = sphi 0, %s95
      %s110 = sphi 0, %s96
      %s118 = sphi 0, %s120
      %s121 = sphi 0, %s118
      %s122 = sphi 0, %s121
      %s138 = sphi 0, %s122
      %s146 = sphi 0, %s148
      %s149 = sphi 0, %s146
      %s150 = sphi 0, %s149
      %s166 = sphi 0, %s150
    $region4: #{tpu_custom_call.1} parent=1 // loop_header_branch
      %20 = sbr.rel (%p18) target = $region8
    $region5: #{tpu_custom_call.1} parent=1 // loop_body
      %s22 = ssub.s32 %s17, 1
      %s23 = ssub.s32 %s17, 2
      %s30 = sadd.s32 1, %s25
      %p31 = scmp.ge.s32.totalorder %s30, 1
      %s32 = scalar_select %p31, 0, %s30
      %s33 = sadd.s32 1, %s24
      %s34 = scalar_select %p31, %s33, %s24
      %p35 = scmp.ge.s32.totalorder %s34, 2
      %s36 = scalar_select %p35, 0, %s34
      %s37 = ssub.s32 %s24, %s36
      %s38 = ssub.s32 %s25, %s32
      %s39 = sor.u32 %s37, %s38
      %p40 = scmp.eq.s32.totalorder %s39, 0
      %s42 = sadd.s32 %s41, 1
      %s43 = scalar_select %p40, %s41, %s42
      %p46 = pneg %p40
      %p47 = scmp.eq.s32.totalorder %s17, 1
      %p48 = por %p46, %p47
      %p49 = scmp.ne.s32.totalorder %s41, %s44
      %p50 = scmp.eq.s32.totalorder %s17, 0
      %p51 = por %p49, %p50
      %p52 = scmp.ne.s32.totalorder %s41, %s44
      %p53 = scmp.eq.s32.totalorder %s22, 1
      %p54 = por %p52, %p53
      %p55 = scmp.ne.s32.totalorder %s44, %s45
      %p56 = scmp.eq.s32.totalorder %s22, 0
      %p57 = por %p55, %p56
      %p58 = scmp.ne.s32.totalorder %s44, %s45
      %p59 = scmp.eq.s32.totalorder %s23, 1
      %p60 = por %p58, %p59
      %p62 = scmp.ne.s32.totalorder %s45, %s61
      %p63 = scmp.eq.s32.totalorder %s23, 0
      %p64 = por %p62, %p63
      %s65 = ssub.s32 %s24, %s36
      %s66 = ssub.s32 %s25, %s32
      %s67 = sor.u32 %s65, %s66
      %p68 = scmp.eq.s32.totalorder %s67, 0
      %s70 = sadd.s32 %s69, 1
      %s71 = scalar_select %p68, %s69, %s70
      %p74 = pneg %p68
      %p75 = scmp.eq.s32.totalorder %s17, 1
      %p76 = por %p74, %p75
      %p77 = scmp.ne.s32.totalorder %s69, %s72
      %p78 = scmp.eq.s32.totalorder %s17, 0
      %p79 = por %p77, %p78
      %p80 = scmp.ne.s32.totalorder %s69, %s72
      %p81 = scmp.eq.s32.totalorder %s22, 1
      %p82 = por %p80, %p81
      %p83 = scmp.ne.s32.totalorder %s72, %s73
      %p84 = scmp.eq.s32.totalorder %s22, 0
      %p85 = por %p83, %p84
      %p86 = scmp.ne.s32.totalorder %s72, %s73
      %p87 = scmp.eq.s32.totalorder %s23, 1
      %p88 = por %p86, %p87
      %p90 = scmp.ne.s32.totalorder %s73, %s89
      %p91 = scmp.eq.s32.totalorder %s23, 0
      %p92 = por %p90, %p91
      %s94 = sadd.s32 %s93, 1
      %p97 = scmp.eq.s32.totalorder %s17, 1
      %p98 = scmp.ne.s32.totalorder %s93, %s95
      %p99 = scmp.eq.s32.totalorder %s17, 0
      %p100 = por %p98, %p99
      %p101 = scmp.ne.s32.totalorder %s93, %s95
      %p102 = scmp.eq.s32.totalorder %s22, 1
      %p103 = por %p101, %p102
      %p104 = scmp.ne.s32.totalorder %s95, %s96
      %p105 = scmp.eq.s32.totalorder %s22, 0
      %p106 = por %p104, %p105
      %p107 = scmp.ne.s32.totalorder %s95, %s96
      %p108 = scmp.eq.s32.totalorder %s23, 1
      %p109 = por %p107, %p108
      %p111 = scmp.ne.s32.totalorder %s96, %s110
      %p112 = scmp.eq.s32.totalorder %s23, 0
      %p113 = por %p111, %p112
      %s114 = sadd.s32 %s24, %s25
      %s115 = sadd.s32 %s36, %s32
      %s116 = ssub.s32 %s114, %s115
      %p117 = scmp.eq.s32.totalorder %s116, 0
      %s119 = sadd.s32 %s118, 1
      %s120 = scalar_select %p117, %s118, %s119
      %p123 = pneg %p117
      %p124 = scmp.eq.s32.totalorder %s17, 1
      %p125 = por %p123, %p124
      %p126 = scmp.ne.s32.totalorder %s118, %s121
      %p127 = scmp.eq.s32.totalorder %s17, 0
      %p128 = por %p126, %p127
      %p129 = scmp.ne.s32.totalorder %s118, %s121
      %p130 = scmp.eq.s32.totalorder %s22, 1
      %p131 = por %p129, %p130
      %p132 = scmp.ne.s32.totalorder %s121, %s122
      %p133 = scmp.eq.s32.totalorder %s22, 0
      %p134 = por %p132, %p133
      %p135 = scmp.ne.s32.totalorder %s121, %s122
      %p136 = scmp.eq.s32.totalorder %s23, 1
      %p137 = por %p135, %p136
      %p139 = scmp.ne.s32.totalorder %s122, %s138
      %p140 = scmp.eq.s32.totalorder %s23, 0
      %p141 = por %p139, %p140
      %s142 = sadd.s32 %s24, %s25
      %s143 = sadd.s32 %s36, %s32
      %s144 = ssub.s32 %s142, %s143
      %p145 = scmp.eq.s32.totalorder %s144, 0
      %s147 = sadd.s32 %s146, 1
      %s148 = scalar_select %p145, %s146, %s147
      %p151 = pneg %p145
      %p152 = scmp.eq.s32.totalorder %s17, 1
      %p153 = por %p151, %p152
      %p154 = scmp.ne.s32.totalorder %s146, %s149
      %p155 = scmp.eq.s32.totalorder %s17, 0
      %p156 = por %p154, %p155
      %p157 = scmp.ne.s32.totalorder %s146, %s149
      %p158 = scmp.eq.s32.totalorder %s22, 1
      %p159 = por %p157, %p158
      %p160 = scmp.ne.s32.totalorder %s149, %s150
      %p161 = scmp.eq.s32.totalorder %s22, 0
      %p162 = por %p160, %p161
      %p163 = scmp.ne.s32.totalorder %s149, %s150
      %p164 = scmp.eq.s32.totalorder %s23, 1
      %p165 = por %p163, %p164
      %p167 = scmp.ne.s32.totalorder %s150, %s166
      %p168 = scmp.eq.s32.totalorder %s23, 0
      %p169 = por %p167, %p168
      %p170 = scmp.le.s32.totalorder 1, %s17
      %p171 = scmp.lt.s32.totalorder %s17, 3
      %p172 = pnand %p170, %p171
      %p173 = pneg %p172
      // Predicated region
      $region9: #{tpu_custom_call.1} parent=5 // pred_check
        _
      $region10: #{tpu_custom_call.1} parent=5 // pred_check_branch
        %175 = sbr.rel (%p172) target = $region12
      $region11: #{tpu_custom_call.1} parent=5 // pred_region
        %s176 = ssub.s32 %s17, 1
        // Predicated region
        $region13: #{tpu_custom_call.1} parent=11 // pred_check
          %p177 = pneg %p106
        $region14: #{tpu_custom_call.1} parent=11 // pred_check_branch
          %179 = sbr.rel (%p177) target = $region16
        $region15: #{tpu_custom_call.1} parent=11 // pred_region
          _
        $region16: #{tpu_custom_call.1} parent=11 // pred_fallthru
          _
      $region12: #{tpu_custom_call.1} parent=5 // pred_fallthru
        _
      %p180 = scmp.lt.s32.totalorder %s17, 2
      // Predicated region
      $region17: #{tpu_custom_call.1} parent=5 // pred_check
        %p181 = pneg %p180
      $region18: #{tpu_custom_call.1} parent=5 // pred_check_branch
        %183 = sbr.rel (%p181) target = $region20
      $region19: #{tpu_custom_call.1} parent=5 // pred_region
        // Predicated region
        $region21: #{tpu_custom_call.1} parent=19 // pred_check
          %p184 = pneg %p51
        $region22: #{tpu_custom_call.1} parent=19 // pred_check_branch
          %186 = sbr.rel (%p184) target = $region24
        $region23: #{tpu_custom_call.1} parent=19 // pred_region
          %s187 = smul.u32 2, %s25
          %p188 = scmp.lt.s32.totalorder %s24, 1
          %s189 = scalar_select %p188, %s24, 1
          %p190 = scmp.lt.s32.totalorder %s187, 1
          %s191 = scalar_select %p190, %s187, 1
          %s192 = smul.addr %s189, 2
          %s193 = sadd.s32 %s191, %s192
          %s194 = smul.addr %s193, 8
          %s195 = scalar_lea.vmem %s0, %s194
          %s196 = smul.u32 2, %s25
        $region24: #{tpu_custom_call.1} parent=19 // pred_fallthru
          _
        // Predicated region
        $region25: #{tpu_custom_call.1} parent=19 // pred_check
          %p197 = pneg %p79
        $region26: #{tpu_custom_call.1} parent=19 // pred_check_branch
          %199 = sbr.rel (%p197) target = $region28
        $region27: #{tpu_custom_call.1} parent=19 // pred_region
          %s200 = smul.u32 2, %s25
          %p201 = scmp.lt.s32.totalorder %s24, 1
          %s202 = scalar_select %p201, %s24, 1
          %p203 = scmp.lt.s32.totalorder %s200, 1
          %s204 = scalar_select %p203, %s200, 1
          %s205 = smul.addr %s202, 2
          %s206 = sadd.s32 %s204, %s205
          %s207 = smul.addr %s206, 8
          %s208 = scalar_lea.vmem %s1, %s207
          %s209 = smul.u32 2, %s25
        $region28: #{tpu_custom_call.1} parent=19 // pred_fallthru
          _
      $region20: #{tpu_custom_call.1} parent=5 // pred_fallthru
        _
      %p210 = scmp.le.s32.totalorder 1, %s17
      %p211 = scmp.lt.s32.totalorder %s17, 3
      %p212 = pnand %p210, %p211
      %p213 = pneg %p212
      // Predicated region
      $region29: #{tpu_custom_call.1} parent=5 // pred_check
        _
      $region30: #{tpu_custom_call.1} parent=5 // pred_check_branch
        %215 = sbr.rel (%p212) target = $region32
      $region31: #{tpu_custom_call.1} parent=5 // pred_region
        %s216 = ssub.s32 %s17, 1
        %s217 = smul.u32 2, %s27
        %p218 = scmp.lt.s32.totalorder %s26, 1
        %s219 = scalar_select %p218, %s26, 1
        %p220 = scmp.lt.s32.totalorder %s217, 1
        %s221 = scalar_select %p220, %s217, 1
        %s222 = smul.addr %s219, 2
        %s223 = sadd.s32 %s221, %s222
        %s224 = smul.addr %s223, 8
        %s225 = scalar_lea.vmem %s0, %s224
        %p226 = pneg %p57
        %p227 = pneg %p54
        %s228 = smul.u32 2, %s27
        %p229 = scmp.lt.s32.totalorder %s26, 1
        %s230 = scalar_select %p229, %s26, 1
        %p231 = scmp.lt.s32.totalorder %s228, 1
        %s232 = scalar_select %p231, %s228, 1
        %s233 = smul.addr %s230, 2
        %s234 = sadd.s32 %s232, %s233
        %s235 = smul.addr %s234, 8
        %s236 = scalar_lea.vmem %s1, %s235
        %p237 = pneg %p85
        %p238 = pneg %p82
        %p239 = pneg %p106
        %p240 = pneg %p103
        %p241 = pneg %p134
        %p242 = pneg %p131
        %s243 = sand.u32 %s121, 1
        %s244 = scalar_lea.sflag [#allocation3], %s243
        %s245 = sand.u32 %s121, 1
        %s246 = scalar_lea.vmem [#allocation2], %s245
        %p247 = pneg %p162
        %p248 = pneg %p159
        %s249 = sand.u32 %s149, 1
        %s250 = scalar_lea.sflag [#allocation5], %s249
        %s251 = sand.u32 %s149, 1
        %s252 = scalar_lea.vmem [#allocation4], %s251
        %s253 = smul.u32 2, %s27
        %p254 = scmp.lt.s32.totalorder %s26, 1
        %s255 = scalar_select %p254, %s26, 1
        %p256 = scmp.lt.s32.totalorder %s253, 1
        %s257 = scalar_select %p256, %s253, 1
        %s258 = smul.addr %s255, 2
        %s259 = sadd.s32 %s257, %s258
        %s260 = smul.addr %s259, 8
        %s261 = scalar_lea.vmem %s0, %s260
        %s262 = smul.u32 2, %s27
        %s263 = smul.u32 2, %s27
        %p264 = scmp.lt.s32.totalorder %s26, 1
        %s265 = scalar_select %p264, %s26, 1
        %p266 = scmp.lt.s32.totalorder %s263, 1
        %s267 = scalar_select %p266, %s263, 1
        %s268 = smul.addr %s265, 2
        %s269 = sadd.s32 %s267, %s268
        %s270 = smul.addr %s269, 8
        %s271 = scalar_lea.vmem %s1, %s270
        %s272 = smul.u32 2, %s27
        %s273 = sadd.s32 %s26, %s27
        %s274 = sadd.s32 %s26, %s27
        %v275 = vld [vmem:[%s261] sm:$0xff]
        %v276 = vld [vmem:[%s261 + $0x8] sm:$0xff]
        %v277 = vld [vmem:[%s271] sm:$0xff]
        %v278 = vld [vmem:[%s271 + $0x8] sm:$0xff]
        %v279 = vld [vmem:[%s2] sm:$0x1]
        %v280 = vlaneseq
        %v281 = vand.u32 %v280, 127
        %282 = vset.pattern.permute.xlu0 0
        %283 = vperm.xlu0 %282, %v277
        %v284 = vpop.permute.xlu0 %283
        %285 = vset.pattern.permute.xlu0 0
        %286 = vperm.xlu0 %285, %v278
        %v287 = vpop.permute.xlu0 %286
        %vm288 = vcmp.eq.s32.totalorder %v281, %v284
        %vm289 = vcmp.eq.s32.totalorder %v281, %v287
        %v290 = vsel %vm288, 1, 0
        %v291 = vsel %vm289, 1, 0
        %v292 = vcvt.s32.f32 %v290
        %v293 = vcvt.s32.f32 %v291
        %294 = vmax.xlane.f32.xlu0 %v275
        %v295 = vpop.xlane.xlu0 %294
        %296 = vmax.xlane.f32.xlu0 %v276
        %v297 = vpop.xlane.xlu0 %296
        %v298 = vsub.f32 %v275, %v295
        %v299 = vsub.f32 %v276, %v297
        %v300 = vmul.f32 %v298, 1.442695
        %v301 = vpow.pop %v300
        %v302 = vmul.f32 %v299, 1.442695
        %v303 = vpow.pop %v302
        %304 = vadd.xlane.f32.xlu0 %v301
        %v305 = vpop.xlane.xlu0 %304
        %306 = vadd.xlane.f32.xlu0 %v303
        %v307 = vpop.xlane.xlu0 %306
        %v308 = vlog2.pop %v305
        %v309 = vmul.f32 %v308, 0.6931472
        %v310 = vlog2.pop %v307
        %v311 = vmul.f32 %v310, 0.6931472
        %v312 = vadd.f32 %v309, %v295
        %v313 = vadd.f32 %v311, %v297
        %v314 = vmul.f32 %v275, %v292
        %v315 = vmul.f32 %v276, %v293
        %316 = vadd.xlane.f32.xlu0 %v314
        %v317 = vpop.xlane.xlu0 %316
        %318 = vadd.xlane.f32.xlu0 %v315
        %v319 = vpop.xlane.xlu0 %318
        %v321 = vlaneseq
        %v322 = vshrl.u32 %v321, 7
        %v323 = vsub.s32 0, %v322
        %v324 = vrot.slane %v279, %v323
        %v326 = vmul.f32 %v324, %v292
        %v327 = vmul.f32 %v324, %v293
        %328 = vadd.xlane.f32.xlu0 %v326
        %v329 = vpop.xlane.xlu0 %328
        %330 = vadd.xlane.f32.xlu0 %v327
        %v331 = vpop.xlane.xlu0 %330
        %v332 = vsub.f32 %v312, %v317
        %v333 = vsub.f32 %v313, %v319
        %v334 = vmul.f32 %v329, %v332
        %v335 = vmul.f32 %v331, %v333
        %vm336 = vcmask 7168
        %v337 = vsel %vm336, %v334, 0.0
        %v338 = vsel %vm336, %v335, 0.0
        %v339 = vadd.f32 %v337, %v338
        %340 = vadd.xlane.f32.xlu0 %v339
        %v341 = vpop.xlane.xlu0 %340
        %v342 = vrot.slane %v341, 4
        %v343 = vadd.f32 %v341, %v342
        %v344 = vrot.slane %v343, 2
        %v345 = vadd.f32 %v343, %v344
        %v346 = vrot.slane %v345, 1
        %v347 = vadd.f32 %v345, %v346
        %s348 = vtos %v347
        %v349 = vstv %s348
        %350 = vst [vmem:[%s246] sm:$0x1] %v349
        %v351 = vsel %vm336, %v329, 0.0
        %v352 = vsel %vm336, %v331, 0.0
        %v353 = vadd.f32 %v351, %v352
        %354 = vadd.xlane.f32.xlu0 %v353
        %v355 = vpop.xlane.xlu0 %354
        %v356 = vrot.slane %v355, 4
        %v357 = vadd.f32 %v355, %v356
        %v358 = vrot.slane %v357, 2
        %v359 = vadd.f32 %v357, %v358
        %v360 = vrot.slane %v359, 1
        %v361 = vadd.f32 %v359, %v360
        %s362 = vtos %v361
        %v363 = vstv %s362
        %364 = vst [vmem:[%s252] sm:$0x1] %v363
        %s365 = sand.u32 %s121, 1
        %s366 = scalar_lea.sflag [#allocation3], %s365
        %s367 = sand.u32 %s121, 1
        %s368 = scalar_lea.vmem [#allocation2], %s367
        %s369 = sand.u32 %s149, 1
        %s370 = scalar_lea.sflag [#allocation5], %s369
        %s371 = sand.u32 %s149, 1
        %s372 = scalar_lea.vmem [#allocation4], %s371
        // Predicated region
        $region33: #{tpu_custom_call.1} parent=31 // pred_check
          %p373 = pneg %p131
        $region34: #{tpu_custom_call.1} parent=31 // pred_check_branch
          %375 = sbr.rel (%p373) target = $region36
        $region35: #{tpu_custom_call.1} parent=31 // pred_region
          %s376 = sadd.s32 %s26, %s27
          %s378 = ssub.s32 16, 16
          %379 = vsyncadd %s366, %s378
          %s380 = smul.addr %s376, 16
          %s381 = scalar_lea.hbm %s3, %s380
          %s383 = sshll.u32 %s368, 4
          %s384 = int_to_ptr.vmem [resolvable:$true] %s383
          %386 = dma.vmem_to_hbm [thread:$0]  %s384, 16, %s381, %s366
        $region36: #{tpu_custom_call.1} parent=31 // pred_fallthru
          _
        // Predicated region
        $region37: #{tpu_custom_call.1} parent=31 // pred_check
          %p387 = pneg %p159
        $region38: #{tpu_custom_call.1} parent=31 // pred_check_branch
          %389 = sbr.rel (%p387) target = $region40
        $region39: #{tpu_custom_call.1} parent=31 // pred_region
          %s390 = sadd.s32 %s26, %s27
          %s392 = ssub.s32 16, 16
          %393 = vsyncadd %s370, %s392
          %s394 = smul.addr %s390, 16
          %s395 = scalar_lea.hbm %s4, %s394
          %s397 = sshll.u32 %s372, 4
          %s398 = int_to_ptr.vmem [resolvable:$true] %s397
          %400 = dma.vmem_to_hbm [thread:$0]  %s398, 16, %s395, %s370
        $region40: #{tpu_custom_call.1} parent=31 // pred_fallthru
          _
      $region32: #{tpu_custom_call.1} parent=5 // pred_fallthru
        _
      %p401 = scmp.le.s32.totalorder 2, %s17
      // Predicated region
      $region41: #{tpu_custom_call.1} parent=5 // pred_check
        %p402 = pneg %p401
      $region42: #{tpu_custom_call.1} parent=5 // pred_check_branch
        %404 = sbr.rel (%p402) target = $region44
      $region43: #{tpu_custom_call.1} parent=5 // pred_region
        %s405 = ssub.s32 %s17, 2
        // Predicated region
        $region45: #{tpu_custom_call.1} parent=43 // pred_check
          %p406 = pneg %p137
        $region46: #{tpu_custom_call.1} parent=43 // pred_check_branch
          %408 = sbr.rel (%p406) target = $region48
        $region47: #{tpu_custom_call.1} parent=43 // pred_region
          %s409 = sand.u32 %s122, 1
          %s410 = scalar_lea.sflag [#allocation3], %s409
          %s411 = sand.u32 %s122, 1
          %s412 = scalar_lea.vmem [#allocation2], %s411
          %413 = dma.done %s410, 16
        $region48: #{tpu_custom_call.1} parent=43 // pred_fallthru
          _
        // Predicated region
        $region49: #{tpu_custom_call.1} parent=43 // pred_check
          %p414 = pneg %p165
        $region50: #{tpu_custom_call.1} parent=43 // pred_check_branch
          %416 = sbr.rel (%p414) target = $region52
        $region51: #{tpu_custom_call.1} parent=43 // pred_region
          %s417 = sand.u32 %s150, 1
          %s418 = scalar_lea.sflag [#allocation5], %s417
          %s419 = sand.u32 %s150, 1
          %s420 = scalar_lea.vmem [#allocation4], %s419
          %421 = dma.done %s418, 16
        $region52: #{tpu_custom_call.1} parent=43 // pred_fallthru
          _
      $region44: #{tpu_custom_call.1} parent=5 // pred_fallthru
        _
    $region6: #{tpu_custom_call.1} parent=1 // loop_footer
      %s21 = sadd.s32 1, %s17
    $region7: #{tpu_custom_call.1} parent=1 // loop_footer_branch
      %16 = sbr.rel target = $region3
    $region8: #{tpu_custom_call.1} parent=1 // loop_exit
      _
    %422 = vsyncpa [#allocation3], 1
    %s423 = scalar_lea.sflag [#allocation3], 1
    %424 = vsyncpa %s423, 1
    %425 = vsyncpa [#allocation5], 1
    %s426 = scalar_lea.sflag [#allocation5], 1
    %427 = vsyncpa %s426, 1

</llo_original>
